<compile_context>
chip_gen: v5e
topology: v5e:2x2
jax: 0.10.0
libtpu: 0.0.40
codegen_flags: <defaults>
</compile_context>

<pallas_src>
import functools
import math

import jax
import jax.numpy as jnp
import numpy as np
from jax import lax
from jax.experimental import pallas as pl
from jax.experimental.pallas import tpu as pltpu


NEG_BIG = -1e12   # plain Python float: becomes an in-kernel literal, never a captured constant


def _round_up(x, m):
    return (x + m - 1) // m * m


def _vmem_budget_bytes():
    """~3/4 of the chip's physical VMEM (128 MiB v5e/v6e -> 96 MiB, 64 MiB v7x -> 48 MiB).

    Falls back to the smallest (v7x) budget when no TPU info is available
    (e.g. interpret mode), so the choice is always safe.
    """
    try:
        cap = int(pltpu.get_tpu_info().vmem_capacity_bytes)
    except Exception:
        cap = 64 << 20
    return (cap * 3) // 4


def _choose_tiles(n, d_pad, itemsize, budget):
    """Pick (TM, TN) per chip / dtype / feature dim.

    AI ~ 2*TM/itemsize flops per HBM byte on the streamed col-block side, so
    prefer the largest TM that fits the VMEM budget without paying excessive
    padded-row matmul work; TN mainly amortizes per-step pipeline overhead.
    """
    def vmem_use(tm, tn):
        in_blocks = 2 * (tm + tn) * d_pad * itemsize      # double-buffered row/col blocks
        out_blk = 2 * tm * 128 * 4                        # double-buffered lse output
        scratch = 2 * tm * 128 * 4                        # lane-resident m/l accumulators
        interm = 3 * tm * tn * 4                          # f32 [TM,TN] softmax intermediates
        bias = 2 * tn * 4
        return in_blocks + out_blk + scratch + interm + bias

    cap = _round_up(max(n, 8), 128)                       # no tile larger than the padded problem
    cands = {t for t in (1024, 768, 512, 256, 128) if t <= cap}
    if cap <= 1024:
        cands.add(cap)
    cands = sorted(cands, reverse=True)

    # TM at which the streamed col blocks stop being the HBM roofline
    # (breakeven ~310 flops/byte v7x, ~650 v6e; bf16 -> ~512, f32 -> ~1024).
    tm_target = 256 * itemsize

    best = None   # (key, tm, tn)
    for tm in cands:
        for tn in cands:
            if vmem_use(tm, tn) > budget:
                continue
            padded_work = _round_up(n, tm) * _round_up(n, tn)
            score = padded_work * max(1.0, tm_target / tm) * (1.0 + 128.0 / tn)
            key = (score, -tm, -tn)
            if best is None or key < best[0]:
                best = (key, tm, tn)
    if best is None:                                      # absurdly large D: smallest tile
        return 128, 128
    return best[1], best[2]


def _simcse_lse_kernel(q_ref, kb_ref, bias_ref, out_ref, m_sc, l_sc, *,
                       tm, tn, has_col_pad):
    """One (row-tile, col-tile) step of the online logsumexp over sim/T.

    q_ref    : [TM, D_pad] pre-scaled embeddings (row block)
    kb_ref   : [TN, D_pad] pre-scaled embeddings (col block, streamed)
    bias_ref : [1, TN]     additive column bias (0 real col / -1e12 padded col)
    out_ref  : [TM, 128]   per-row logsumexp, lane-dense, written on last col tile
    m_sc/l_sc: [TM, 128]   lane-resident running max / running sum (per-lane LSE)
    """
    i = pl.program_id(0)                 # row-tile index ("parallel")
    j = pl.program_id(1)                 # col-tile index ("arbitrary" reduction)
    last_j = pl.num_programs(1) - 1

    @pl.when(j == 0)
    def _init():
        m_sc[...] = jnp.full_like(m_sc, -jnp.inf)
        l_sc[...] = jnp.zeros_like(l_sc)

    # sim/T tile on the MXU: contract the feature dim of BOTH operands.
    s = lax.dot_general(
        q_ref[...], kb_ref[...],
        dimension_numbers=(((1,), (1,)), ((), ())),
        preferred_element_type=jnp.float32,
    )                                                        # [TM, TN] f32

    if has_col_pad:
        # One VALU add replaces the old iota/compare/or/select padding mask.
        s = s + bias_ref[...]

    row0 = i * tm
    col0 = j * tn
    diag_here = jnp.logical_and(row0 < col0 + tn, col0 < row0 + tm)

    def _online_update(s_tile):
        # Lane-resident accumulators: per-128-lane element-wise max/exp/add on the
        # VPU; no cross-lane (XLU) reduction and no [TM,1]->[TM,TN] lane broadcast
        # in the inner loop.
        m_acc = m_sc[...]
        l_acc = l_sc[...]
        for k in range(tn // 128):
            sk = s_tile[:, k * 128:(k + 1) * 128]            # static lane-aligned slice
            m_new = jnp.maximum(m_acc, sk)
            l_acc = l_acc * jnp.exp(m_acc - m_new) + jnp.exp(sk - m_new)
            m_acc = m_new
        m_sc[...] = m_acc
        l_sc[...] = l_acc

    @pl.when(diag_here)
    def _masked():
        # Only diagonal-overlapping tiles pay the compare/select; the mask comes
        # from a [TM,1] sublane iota and a [1,TN] lane iota (broadcast equality).
        rg = row0 + lax.broadcasted_iota(jnp.int32, (tm, 1), 0)
        cg = col0 + lax.broadcasted_iota(jnp.int32, (1, tn), 1)
        _online_update(jnp.where(rg == cg, NEG_BIG, s))

    @pl.when(jnp.logical_not(diag_here))
    def _plain():
        _online_update(s)

    @pl.when(j == last_j)
    def _finalize():
        # Single cross-lane combine of the 128 per-lane LSE accumulators.
        m_row = jnp.max(m_sc[...], axis=-1, keepdims=True)                  # [TM, 1]
        l_row = jnp.sum(l_sc[...] * jnp.exp(m_sc[...] - m_row),
                        axis=-1, keepdims=True)
        lse = m_row + jnp.log(l_row)
        out_ref[...] = jnp.broadcast_to(lse, out_ref.shape)                 # lane-dense store


def vanilla_simcse_pallas(x, *, temperature, use_cosine, eps=1e-8, matmul_dtype=None):
    """x: [N, D] embeddings -> scalar SimCSE loss (CrossEntropy, mean reduction)."""
    n, d = x.shape
    if n % 2 != 0:
        raise ValueError("SimCSE requires an even batch (consecutive positive pairs).")
    if temperature <= 0:
        raise ValueError("temperature must be positive.")

    orig_dtype = x.dtype
    xf = x.astype(jnp.float32)
    if use_cosine:
        # Fold cosine normalisation into the operands. Per-row clamp of ||x||^2 at
        # eps; differs from torch's max(||xi||*||xj||, eps) only for near-zero rows.
        inv_norm = lax.rsqrt(jnp.maximum(jnp.sum(xf * xf, axis=-1, keepdims=True), eps))
        xf = xf * inv_norm
    # Fold 1/temperature into BOTH operands: (x/sqrt(T)) @ (x/sqrt(T))^T == sim / T.
    xf = xf * jnp.float32(1.0 / math.sqrt(temperature))

    # MXU operand dtype: keep the caller's dtype by default (bf16 stays bf16; f32
    # stays f32 so the loss matches an f32 reference).  Pass matmul_dtype=jnp.bfloat16
    # to halve HBM traffic / raise MXU rate on f32 inputs (v5e recommendation).
    op_dtype = orig_dtype if matmul_dtype is None else matmul_dtype
    x_hat = xf.astype(op_dtype)

    # Positive-pair logit from the paired rows (partner of row i is i^1). O(N*D);
    # no NxN one-hot label matrix / masked reduction needed.
    xh32 = x_hat.astype(jnp.float32)
    pairs = xh32.reshape(n // 2, 2, d)
    pos = jnp.repeat(jnp.sum(pairs[:, 0, :] * pairs[:, 1, :], axis=-1), 2)   # [N]

    d_pad = _round_up(d, 128)                      # lane-align the feature dim
    itemsize = jnp.dtype(op_dtype).itemsize
    budget = _vmem_budget_bytes()
    tm, tn = _choose_tiles(n, d_pad, itemsize, budget)

    # Decoupled padding: rows only to TM, columns only to TN.
    n_rows = _round_up(n, tm)
    n_cols = _round_up(n, tn)
    n_pad = max(n_rows, n_cols)
    x_pad = jnp.pad(x_hat, ((0, n_pad - n), (0, d_pad - d)))

    has_col_pad = n_cols > n
    col_bias = jnp.where(jnp.arange(n_cols)[None, :] < n, 0.0, NEG_BIG).astype(jnp.float32)

    grid = (n_rows // tm, n_cols // tn)
    kernel = functools.partial(_simcse_lse_kernel, tm=tm, tn=tn, has_col_pad=has_col_pad)

    lse = pl.pallas_call(
        kernel,
        out_shape=jax.ShapeDtypeStruct((n_rows, 128), jnp.float32),
        grid_spec=pltpu.PrefetchScalarGridSpec(
            num_scalar_prefetch=0,
            grid=grid,
            in_specs=[pl.BlockSpec((tm, d_pad), lambda i, j: (i, 0)),   # row block
                      pl.BlockSpec((tn, d_pad), lambda i, j: (j, 0)),   # col block (streamed)
                      pl.BlockSpec((1, tn), lambda i, j: (0, j))],      # column pad bias
            out_specs=pl.BlockSpec((tm, 128), lambda i, j: (i, 0)),
            scratch_shapes=[pltpu.VMEM((tm, 128), jnp.float32),         # running max (per lane)
                            pltpu.VMEM((tm, 128), jnp.float32)],        # running sum (per lane)
        ),
        compiler_params=pltpu.CompilerParams(
            dimension_semantics=("parallel", "arbitrary"),
            vmem_limit_bytes=int(budget)),
    )(x_pad, x_pad, col_bias)

    # CrossEntropy(mean): mean_i( logsumexp_j(sim_ij/T + mask_ij) - sim_{i,partner}/T )
    return jnp.mean(lse[:n, 0] - pos)


class SimcseLossPallas:
    """Mirror of the PyTorch SimcseLoss.forward; config passed as a dict."""

    def __init__(self, config):
        self.config = config
        self.temperature = float(config["temperature"])
        self.use_cosine = config["sim_fct"] == "cos"

    def _vanilla(self, emb):
        return vanilla_simcse_pallas(
            emb, temperature=self.temperature, use_cosine=self.use_cosine
        )

    def __call__(self, query_list, value_list):
        loss = jnp.float32(0.0)
        if self.config["negatives_cross"]:
            sep = len(query_list) // 2
            loss += self._vanilla(
                jnp.concatenate(list(query_list[:sep]) + list(value_list[sep:]), axis=0)
            )
            loss += self._vanilla(
                jnp.concatenate(list(query_list[sep:]) + list(value_list[:sep]), axis=0)
            )
        if self.config["negatives_parallel"]:
            q_all = jnp.concatenate(query_list, axis=0)
            v_all = jnp.concatenate(value_list, axis=0)
            if not self.config["negatives_parallel_single"]:
                loss += self._vanilla(q_all)
            loss += self._vanilla(v_all)
        return loss


def _vanilla_simcse_ref(x, temperature, use_cosine, eps=1e-8):
    """Pure-JAX reference (mirrors the PyTorch math) for correctness checking."""
    x = x.astype(jnp.float32)
    n = x.shape[0]
    gram = x @ x.T
    if use_cosine:
        norm = jnp.sqrt(jnp.sum(x * x, axis=-1, keepdims=True))
        sim = gram / jnp.maximum(norm * norm.T, eps)
    else:
        sim = gram
    sim = sim / temperature - jnp.eye(n, dtype=jnp.float32) * 1e12
    idx = jnp.arange(n)
    labels = idx + 1 - 2 * (idx % 2)
    logp = jax.nn.log_softmax(sim, axis=-1)
    return -jnp.mean(logp[idx, labels])


if __name__ == "__main__":
    # Synthetic config (matches the fields the PyTorch module reads).
    config = {
        "sim_fct": "cos",
        "temperature": 0.05,
        "negatives_cross": True,
        "negatives_parallel": True,
        "negatives_parallel_single": False,
    }

    # Small deterministic inputs: 2 query chunks + 2 value chunks, each [4, 32].
    key = jax.random.PRNGKey(0)
    k1, k2, k3, k4 = jax.random.split(key, 4)
    b, d = 4, 32
    query_list = [jax.random.normal(k1, (b, d), jnp.float32),
                  jax.random.normal(k2, (b, d), jnp.float32)]
    value_list = [jax.random.normal(k3, (b, d), jnp.float32),
                  jax.random.normal(k4, (b, d), jnp.float32)]

    loss_mod = SimcseLossPallas(config)
    loss = loss_mod(query_list, value_list)
    loss = jax.block_until_ready(loss)

    # Sanity check against a pure-JAX reference of the same forward pass.
    sep = len(query_list) // 2
    ref = 0.0
    ref += _vanilla_simcse_ref(
        jnp.concatenate(list(query_list[:sep]) + list(value_list[sep:]), 0),
        config["temperature"], True)
    ref += _vanilla_simcse_ref(
        jnp.concatenate(list(query_list[sep:]) + list(value_list[:sep]), 0),
        config["temperature"], True)
    ref += _vanilla_simcse_ref(jnp.concatenate(query_list, 0), config["temperature"], True)
    ref += _vanilla_simcse_ref(jnp.concatenate(value_list, 0), config["temperature"], True)

    np.testing.assert_allclose(np.asarray(loss), np.asarray(ref), rtol=1e-4, atol=1e-4)
    print("KERNEL_OK")
</pallas_src>

<mosaic_0001>
module attributes {stable_mosaic.version = 11 : i64} {
  func.func @_simcse_lse_kernel(%arg0: i32, %arg1: i32, %arg2: memref<128x128xf32, #tpu.memory_space<vmem>>, %arg3: memref<128x128xf32, #tpu.memory_space<vmem>>, %arg4: memref<1x128xf32, #tpu.memory_space<vmem>>, %arg5: memref<128x128xf32, #tpu.memory_space<vmem>>, %arg6: memref<128x128xf32, #tpu.memory_space<vmem>>, %arg7: memref<128x128xf32, #tpu.memory_space<vmem>>) attributes {dimension_semantics = [#tpu.dimension_semantics<parallel>, #tpu.dimension_semantics<arbitrary>], iteration_bounds = array<i64: 1, 1>, scalar_prefetch = 0 : i64, scratch_operands = 2 : i64, tpu.core_type = #tpu.core_type<tc>, window_params = [{transform_indices = @transform_0, window_bounds = array<i64: 128, 128>}, {transform_indices = @transform_1, window_bounds = array<i64: 128, 128>}, {transform_indices = @transform_2, window_bounds = array<i64: 1, 128>}, {transform_indices = @transform_3, window_bounds = array<i64: 128, 128>}]} {
    %c0_i32 = arith.constant 0 : i32
    %0 = arith.cmpi eq, %arg1, %c0_i32 : i32
    %1 = arith.extui %0 : i1 to i32
    %c0_i32_0 = arith.constant 0 : i32
    %2 = arith.cmpi ne, %1, %c0_i32_0 : i32
    scf.if %2 {
      %cst_13 = arith.constant 0xFF800000 : f32
      %24 = vector.broadcast %cst_13 : f32 to vector<128x128xf32>
      %c0_14 = arith.constant 0 : index
      %c0_15 = arith.constant 0 : index
      %25 = vector.load %arg6[%c0_14, %c0_15] : memref<128x128xf32, #tpu.memory_space<vmem>>, vector<128x128xf32>
      tpu.vector_store %arg6[%c0_14, %c0_15], %24 {strides = array<i32>} : memref<128x128xf32, #tpu.memory_space<vmem>>, vector<128x128xf32>,
      %cst_16 = arith.constant 0.000000e+00 : f32
      %26 = vector.broadcast %cst_16 : f32 to vector<128x128xf32>
      %c0_17 = arith.constant 0 : index
      %c0_18 = arith.constant 0 : index
      %27 = vector.load %arg7[%c0_17, %c0_18] : memref<128x128xf32, #tpu.memory_space<vmem>>, vector<128x128xf32>
      tpu.vector_store %arg7[%c0_17, %c0_18], %26 {strides = array<i32>} : memref<128x128xf32, #tpu.memory_space<vmem>>, vector<128x128xf32>,
    } else {
    }
    %c0 = arith.constant 0 : index
    %c0_1 = arith.constant 0 : index
    %3 = vector.load %arg2[%c0, %c0_1] : memref<128x128xf32, #tpu.memory_space<vmem>>, vector<128x128xf32>
    %c0_2 = arith.constant 0 : index
    %c0_3 = arith.constant 0 : index
    %4 = vector.load %arg3[%c0_2, %c0_3] : memref<128x128xf32, #tpu.memory_space<vmem>>, vector<128x128xf32>
    %cst = arith.constant dense<0.000000e+00> : vector<128x128xf32>
    %5 = tpu.matmul %3, %4, %cst {dimension_numbers = #tpu.dot_dimension_numbers<[1], [1], [0], [0], [0, 0, 1, 0], [], []>} : vector<128x128xf32>, vector<128x128xf32>, vector<128x128xf32> -> vector<128x128xf32>
    %c0_4 = arith.constant 0 : index
    %c0_5 = arith.constant 0 : index
    %6 = vector.load %arg4[%c0_4, %c0_5] : memref<1x128xf32, #tpu.memory_space<vmem>>, vector<1x128xf32>
    %7 = vector.broadcast %6 : vector<1x128xf32> to vector<128x128xf32>
    %8 = arith.addf %5, %7 : vector<128x128xf32>
    %c128_i32 = arith.constant 128 : i32
    %9 = arith.muli %arg0, %c128_i32 : i32
    %c128_i32_6 = arith.constant 128 : i32
    %10 = arith.muli %arg1, %c128_i32_6 : i32
    %c128_i32_7 = arith.constant 128 : i32
    %11 = arith.addi %10, %c128_i32_7 : i32
    %12 = arith.cmpi slt, %9, %11 : i32
    %c128_i32_8 = arith.constant 128 : i32
    %13 = arith.addi %9, %c128_i32_8 : i32
    %14 = arith.cmpi slt, %10, %13 : i32
    %15 = arith.andi %12, %14 : i1
    %16 = arith.extui %15 : i1 to i32
    %c0_i32_9 = arith.constant 0 : i32
    %17 = arith.cmpi ne, %16, %c0_i32_9 : i32
    scf.if %17 {
      %24 = tpu.iota {dimensions = array<i32: 0>} : vector<128x1xi32>
      %25 = vector.broadcast %9 : i32 to vector<128x1xi32>
      %26 = arith.addi %25, %24 : vector<128x1xi32>
      %27 = tpu.iota {dimensions = array<i32: 1>} : vector<1x128xi32>
      %28 = vector.broadcast %10 : i32 to vector<1x128xi32>
      %29 = arith.addi %28, %27 : vector<1x128xi32>
      %30 = vector.broadcast %26 : vector<128x1xi32> to vector<128x128xi32>
      %31 = vector.broadcast %29 : vector<1x128xi32> to vector<128x128xi32>
      %32 = arith.cmpi eq, %30, %31 : vector<128x128xi32>
      %cst_13 = arith.constant -9.99999995E+11 : f32
      %33 = vector.broadcast %cst_13 : f32 to vector<128x128xf32>
      %34 = arith.select %32, %33, %8 : vector<128x128xi1>, vector<128x128xf32>
      %c0_14 = arith.constant 0 : index
      %c0_15 = arith.constant 0 : index
      %35 = vector.load %arg6[%c0_14, %c0_15] : memref<128x128xf32, #tpu.memory_space<vmem>>, vector<128x128xf32>
      %c0_16 = arith.constant 0 : index
      %c0_17 = arith.constant 0 : index
      %36 = vector.load %arg7[%c0_16, %c0_17] : memref<128x128xf32, #tpu.memory_space<vmem>>, vector<128x128xf32>
      %37 = arith.maximumf %35, %34 : vector<128x128xf32>
      %38 = arith.subf %35, %37 : vector<128x128xf32>
      %39 = math.exp %38 : vector<128x128xf32>
      %40 = arith.mulf %36, %39 : vector<128x128xf32>
      %41 = arith.subf %34, %37 : vector<128x128xf32>
      %42 = math.exp %41 : vector<128x128xf32>
      %43 = arith.addf %40, %42 : vector<128x128xf32>
      %c0_18 = arith.constant 0 : index
      %c0_19 = arith.constant 0 : index
      %44 = vector.load %arg6[%c0_18, %c0_19] : memref<128x128xf32, #tpu.memory_space<vmem>>, vector<128x128xf32>
      tpu.vector_store %arg6[%c0_18, %c0_19], %37 {strides = array<i32>} : memref<128x128xf32, #tpu.memory_space<vmem>>, vector<128x128xf32>,
      %c0_20 = arith.constant 0 : index
      %c0_21 = arith.constant 0 : index
      %45 = vector.load %arg7[%c0_20, %c0_21] : memref<128x128xf32, #tpu.memory_space<vmem>>, vector<128x128xf32>
      tpu.vector_store %arg7[%c0_20, %c0_21], %43 {strides = array<i32>} : memref<128x128xf32, #tpu.memory_space<vmem>>, vector<128x128xf32>,
    } else {
    }
    %true = arith.constant true
    %18 = arith.xori %15, %true : i1
    %19 = arith.extui %18 : i1 to i32
    %c0_i32_10 = arith.constant 0 : i32
    %20 = arith.cmpi ne, %19, %c0_i32_10 : i32
    scf.if %20 {
      %c0_13 = arith.constant 0 : index
      %c0_14 = arith.constant 0 : index
      %24 = vector.load %arg6[%c0_13, %c0_14] : memref<128x128xf32, #tpu.memory_space<vmem>>, vector<128x128xf32>
      %c0_15 = arith.constant 0 : index
      %c0_16 = arith.constant 0 : index
      %25 = vector.load %arg7[%c0_15, %c0_16] : memref<128x128xf32, #tpu.memory_space<vmem>>, vector<128x128xf32>
      %26 = arith.maximumf %24, %8 : vector<128x128xf32>
      %27 = arith.subf %24, %26 : vector<128x128xf32>
      %28 = math.exp %27 : vector<128x128xf32>
      %29 = arith.mulf %25, %28 : vector<128x128xf32>
      %30 = arith.subf %8, %26 : vector<128x128xf32>
      %31 = math.exp %30 : vector<128x128xf32>
      %32 = arith.addf %29, %31 : vector<128x128xf32>
      %c0_17 = arith.constant 0 : index
      %c0_18 = arith.constant 0 : index
      %33 = vector.load %arg6[%c0_17, %c0_18] : memref<128x128xf32, #tpu.memory_space<vmem>>, vector<128x128xf32>
      tpu.vector_store %arg6[%c0_17, %c0_18], %26 {strides = array<i32>} : memref<128x128xf32, #tpu.memory_space<vmem>>, vector<128x128xf32>,
      %c0_19 = arith.constant 0 : index
      %c0_20 = arith.constant 0 : index
      %34 = vector.load %arg7[%c0_19, %c0_20] : memref<128x128xf32, #tpu.memory_space<vmem>>, vector<128x128xf32>
      tpu.vector_store %arg7[%c0_19, %c0_20], %32 {strides = array<i32>} : memref<128x128xf32, #tpu.memory_space<vmem>>, vector<128x128xf32>,
    } else {
    }
    %c0_i32_11 = arith.constant 0 : i32
    %21 = arith.cmpi eq, %arg1, %c0_i32_11 : i32
    %22 = arith.extui %21 : i1 to i32
    %c0_i32_12 = arith.constant 0 : i32
    %23 = arith.cmpi ne, %22, %c0_i32_12 : i32
    scf.if %23 {
      %c0_13 = arith.constant 0 : index
      %c0_14 = arith.constant 0 : index
      %24 = vector.load %arg6[%c0_13, %c0_14] : memref<128x128xf32, #tpu.memory_space<vmem>>, vector<128x128xf32>
      %cst_15 = arith.constant dense<0xFF800000> : vector<128xf32>
      %25 = vector.multi_reduction <maximumf>, %24, %cst_15 [1] : vector<128x128xf32> to vector<128xf32>
      %26 = vector.shape_cast %25 : vector<128xf32> to vector<128x1xf32>
      %c0_16 = arith.constant 0 : index
      %c0_17 = arith.constant 0 : index
      %27 = vector.load %arg7[%c0_16, %c0_17] : memref<128x128xf32, #tpu.memory_space<vmem>>, vector<128x128xf32>
      %c0_18 = arith.constant 0 : index
      %c0_19 = arith.constant 0 : index
      %28 = vector.load %arg6[%c0_18, %c0_19] : memref<128x128xf32, #tpu.memory_space<vmem>>, vector<128x128xf32>
      %29 = vector.broadcast %26 : vector<128x1xf32> to vector<128x128xf32>
      %30 = arith.subf %28, %29 : vector<128x128xf32>
      %31 = math.exp %30 : vector<128x128xf32>
      %32 = arith.mulf %27, %31 : vector<128x128xf32>
      %cst_20 = arith.constant dense<0.000000e+00> : vector<128xf32>
      %33 = vector.multi_reduction <add>, %32, %cst_20 [1] : vector<128x128xf32> to vector<128xf32>
      %34 = vector.shape_cast %33 : vector<128xf32> to vector<128x1xf32>
      %35 = math.log %34 : vector<128x1xf32>
      %36 = arith.addf %26, %35 : vector<128x1xf32>
      %37 = vector.shape_cast %36 : vector<128x1xf32> to vector<128x1xf32>
      %38 = vector.broadcast %37 : vector<128x1xf32> to vector<128x128xf32>
      %c0_21 = arith.constant 0 : index
      %c0_22 = arith.constant 0 : index
      %39 = vector.load %arg5[%c0_21, %c0_22] : memref<128x128xf32, #tpu.memory_space<vmem>>, vector<128x128xf32>
      tpu.vector_store %arg5[%c0_21, %c0_22], %38 {strides = array<i32>} : memref<128x128xf32, #tpu.memory_space<vmem>>, vector<128x128xf32>,
    } else {
    }
    return
  }
  func.func @transform_0(%arg0: i32, %arg1: i32) -> (i32, i32) {
    %c0_i32 = arith.constant 0 : i32
    %c0_i32_0 = arith.constant 0 : i32
    return %arg0, %c0_i32 : i32, i32
  }
  func.func @transform_1(%arg0: i32, %arg1: i32) -> (i32, i32) {
    %c0_i32 = arith.constant 0 : i32
    %c0_i32_0 = arith.constant 0 : i32
    return %arg1, %c0_i32 : i32, i32
  }
  func.func @transform_2(%arg0: i32, %arg1: i32) -> (i32, i32) {
    %c0_i32 = arith.constant 0 : i32
    %c0_i32_0 = arith.constant 0 : i32
    return %c0_i32, %arg1 : i32, i32
  }
  func.func @transform_3(%arg0: i32, %arg1: i32) -> (i32, i32) {
    %c0_i32 = arith.constant 0 : i32
    %c0_i32_0 = arith.constant 0 : i32
    return %arg0, %c0_i32 : i32, i32
  }
}

</mosaic_0001>

<llo_original>
// kernel: tpu_custom_call.1
$region0: #{tpu_custom_call.1}
  #allocation0 [shape = 'u32[]', space=smem, size = 0x4, offset = 0x4, fixed_abs, tag = 'smem constant byte address 0x4 - core index']
  #allocation1 [shape = 'u32[72,128]{1,0:T(1,128)}', space=vmem, size = 0x9000, scoped, tag = 'internal scratch']
  #allocation2 [shape = 'f32[128,128]{1,0:T(8,128)}', space=vmem, size = 0x10000, scoped, tag = 'scratch operand']
  #allocation3 [shape = 'f32[128,128]{1,0:T(8,128)}', space=vmem, size = 0x10000, scoped, tag = 'scratch operand']
  %s0 = inlined_call_operand.hbm [shape: f32[128,128], index: 0, kind: input, shape index: {}]
  %s1 = inlined_call_operand.hbm [shape: f32[128,128], index: 1, kind: input, shape index: {}]
  %s2 = inlined_call_operand.vmem [shape: f32[1,128], index: 2, kind: input, shape index: {}]
  %s3 = inlined_call_operand.hbm [shape: f32[128,128], index: 3, kind: output, shape index: {}]
  %s4 = sld [smem:[#allocation0]]
  $region46: #{tpu_custom_call.1} parent=0
    _
  %s6 = ssub.s32 1, %s4
  %s7 = scalar_select 0, %s6, %s4
  $region1: #{tpu_custom_call.1} parent=0
    #allocation4 [shape = 'u8[65536]{0}', space=vmem, size = 0x10000, scoped, tag = 'input window, operand 0, single buffered']
    #allocation5 [shape = 's32[1]{0}', space=sflag, size = 0x4, scoped, tag = 'scoped memory for tpu_custom_call.1']
    #allocation6 [shape = 's32[1]{0}', space=sflag, size = 0x4, scoped, tag = 'scoped memory for tpu_custom_call.1']
    #allocation7 [shape = 'u8[65536]{0}', space=vmem, size = 0x10000, scoped, tag = 'input window, operand 1, single buffered']
    #allocation8 [shape = 's32[1]{0}', space=sflag, size = 0x4, scoped, tag = 'scoped memory for tpu_custom_call.1']
    #allocation9 [shape = 'u8[65536]{0}', space=vmem, size = 0x10000, scoped, tag = 'output window, operand 0, single buffered']
    %8 = vsyncpa [#allocation5], 0
    %9 = vsyncpa [#allocation8], 0
    %10 = vsyncpa [#allocation6], 0
    // Predicated region
    $region2: #{tpu_custom_call.1} parent=1 // pred_check
      _
    $region3: #{tpu_custom_call.1} parent=1 // pred_check_branch
      %12 = sbr.rel (0) target = $region5
    $region4: #{tpu_custom_call.1} parent=1 // pred_region
      %14 = vsyncadd [#allocation5], 0
      %s15 = sshll.u32 %s0, 4
      %s16 = int_to_ptr.hbm [resolvable:$true] %s15
      %s17 = sshll.u32 [#allocation4], 4
      %s18 = int_to_ptr.vmem [resolvable:$true] %s17
      %23 = dma.hbm_to_vmem [thread:$0]  %s16, 2048, %s18, [#allocation5], 128, 128, 8
    $region5: #{tpu_custom_call.1} parent=1 // pred_fallthru
      _
    // Predicated region
    $region6: #{tpu_custom_call.1} parent=1 // pred_check
      _
    $region7: #{tpu_custom_call.1} parent=1 // pred_check_branch
      %25 = sbr.rel (0) target = $region9
    $region8: #{tpu_custom_call.1} parent=1 // pred_region
      %27 = vsyncadd [#allocation8], 0
      %s28 = sshll.u32 %s1, 4
      %s29 = int_to_ptr.hbm [resolvable:$true] %s28
      %s30 = sshll.u32 [#allocation7], 4
      %s31 = int_to_ptr.vmem [resolvable:$true] %s30
      %36 = dma.hbm_to_vmem [thread:$0]  %s29, 2048, %s31, [#allocation8], 128, 128, 8
    $region9: #{tpu_custom_call.1} parent=1 // pred_fallthru
      _
    // Predicated region
    $region10: #{tpu_custom_call.1} parent=1 // pred_check
      _
    $region11: #{tpu_custom_call.1} parent=1 // pred_check_branch
      %38 = sbr.rel (0) target = $region13
    $region12: #{tpu_custom_call.1} parent=1 // pred_region
      _
    $region13: #{tpu_custom_call.1} parent=1 // pred_fallthru
      _
    // Predicated region
    $region14: #{tpu_custom_call.1} parent=1 // pred_check
      _
    $region15: #{tpu_custom_call.1} parent=1 // pred_check_branch
      %40 = sbr.rel (0) target = $region17
    $region16: #{tpu_custom_call.1} parent=1 // pred_region
      %42 = dma.done [#allocation5], 2048
    $region17: #{tpu_custom_call.1} parent=1 // pred_fallthru
      _
    // Predicated region
    $region18: #{tpu_custom_call.1} parent=1 // pred_check
      _
    $region19: #{tpu_custom_call.1} parent=1 // pred_check_branch
      %44 = sbr.rel (0) target = $region21
    $region20: #{tpu_custom_call.1} parent=1 // pred_region
      %46 = dma.done [#allocation8], 2048
    $region21: #{tpu_custom_call.1} parent=1 // pred_fallthru
      _
    %p47 = scmp.eq.s32.totalorder 0, 0
    // Predicated region
    $region22: #{tpu_custom_call.1} parent=1 // pred_check
      %p48 = pneg %p47
    $region23: #{tpu_custom_call.1} parent=1 // pred_check_branch
      %50 = sbr.rel (%p48) target = $region25
    $region24: #{tpu_custom_call.1} parent=1 // pred_region
      %51 = vst [vmem:[#allocation2] sm:$0xff] -inf
      %52 = vst [vmem:[#allocation2 + $0x8] sm:$0xff] -inf
      %53 = vst [vmem:[#allocation2 + $0x10] sm:$0xff] -inf
      %54 = vst [vmem:[#allocation2 + $0x18] sm:$0xff] -inf
      %55 = vst [vmem:[#allocation2 + $0x20] sm:$0xff] -inf
      %56 = vst [vmem:[#allocation2 + $0x28] sm:$0xff] -inf
      %57 = vst [vmem:[#allocation2 + $0x30] sm:$0xff] -inf
      %58 = vst [vmem:[#allocation2 + $0x38] sm:$0xff] -inf
      %59 = vst [vmem:[#allocation2 + $0x40] sm:$0xff] -inf
      %60 = vst [vmem:[#allocation2 + $0x48] sm:$0xff] -inf
      %61 = vst [vmem:[#allocation2 + $0x50] sm:$0xff] -inf
      %62 = vst [vmem:[#allocation2 + $0x58] sm:$0xff] -inf
      %63 = vst [vmem:[#allocation2 + $0x60] sm:$0xff] -inf
      %64 = vst [vmem:[#allocation2 + $0x68] sm:$0xff] -inf
      %65 = vst [vmem:[#allocation2 + $0x70] sm:$0xff] -inf
      %66 = vst [vmem:[#allocation2 + $0x78] sm:$0xff] -inf
      %67 = vst [vmem:[#allocation3] sm:$0xff] 0.0
      %68 = vst [vmem:[#allocation3 + $0x8] sm:$0xff] 0.0
      %69 = vst [vmem:[#allocation3 + $0x10] sm:$0xff] 0.0
      %70 = vst [vmem:[#allocation3 + $0x18] sm:$0xff] 0.0
      %71 = vst [vmem:[#allocation3 + $0x20] sm:$0xff] 0.0
      %72 = vst [vmem:[#allocation3 + $0x28] sm:$0xff] 0.0
      %73 = vst [vmem:[#allocation3 + $0x30] sm:$0xff] 0.0
      %74 = vst [vmem:[#allocation3 + $0x38] sm:$0xff] 0.0
      %75 = vst [vmem:[#allocation3 + $0x40] sm:$0xff] 0.0
      %76 = vst [vmem:[#allocation3 + $0x48] sm:$0xff] 0.0
      %77 = vst [vmem:[#allocation3 + $0x50] sm:$0xff] 0.0
      %78 = vst [vmem:[#allocation3 + $0x58] sm:$0xff] 0.0
      %79 = vst [vmem:[#allocation3 + $0x60] sm:$0xff] 0.0
      %80 = vst [vmem:[#allocation3 + $0x68] sm:$0xff] 0.0
      %81 = vst [vmem:[#allocation3 + $0x70] sm:$0xff] 0.0
      %82 = vst [vmem:[#allocation3 + $0x78] sm:$0xff] 0.0
    $region25: #{tpu_custom_call.1} parent=1 // pred_fallthru
      _
    %v83 = vld [vmem:[#allocation4] sm:$0xff]
    %v84 = vld [vmem:[#allocation4 + $0x8] sm:$0xff]
    %v85 = vld [vmem:[#allocation4 + $0x10] sm:$0xff]
    %v86 = vld [vmem:[#allocation4 + $0x18] sm:$0xff]
    %v87 = vld [vmem:[#allocation4 + $0x20] sm:$0xff]
    %v88 = vld [vmem:[#allocation4 + $0x28] sm:$0xff]
    %v89 = vld [vmem:[#allocation4 + $0x30] sm:$0xff]
    %v90 = vld [vmem:[#allocation4 + $0x38] sm:$0xff]
    %v91 = vld [vmem:[#allocation4 + $0x40] sm:$0xff]
    %v92 = vld [vmem:[#allocation4 + $0x48] sm:$0xff]
    %v93 = vld [vmem:[#allocation4 + $0x50] sm:$0xff]
    %v94 = vld [vmem:[#allocation4 + $0x58] sm:$0xff]
    %v95 = vld [vmem:[#allocation4 + $0x60] sm:$0xff]
    %v96 = vld [vmem:[#allocation4 + $0x68] sm:$0xff]
    %v97 = vld [vmem:[#allocation4 + $0x70] sm:$0xff]
    %v98 = vld [vmem:[#allocation4 + $0x78] sm:$0xff]
    %v99 = vld [vmem:[#allocation7] sm:$0xff]
    %v100 = vld [vmem:[#allocation7 + $0x8] sm:$0xff]
    %v101 = vld [vmem:[#allocation7 + $0x10] sm:$0xff]
    %v102 = vld [vmem:[#allocation7 + $0x18] sm:$0xff]
    %v103 = vld [vmem:[#allocation7 + $0x20] sm:$0xff]
    %v104 = vld [vmem:[#allocation7 + $0x28] sm:$0xff]
    %v105 = vld [vmem:[#allocation7 + $0x30] sm:$0xff]
    %v106 = vld [vmem:[#allocation7 + $0x38] sm:$0xff]
    %v107 = vld [vmem:[#allocation7 + $0x40] sm:$0xff]
    %v108 = vld [vmem:[#allocation7 + $0x48] sm:$0xff]
    %v109 = vld [vmem:[#allocation7 + $0x50] sm:$0xff]
    %v110 = vld [vmem:[#allocation7 + $0x58] sm:$0xff]
    %v111 = vld [vmem:[#allocation7 + $0x60] sm:$0xff]
    %v112 = vld [vmem:[#allocation7 + $0x68] sm:$0xff]
    %v113 = vld [vmem:[#allocation7 + $0x70] sm:$0xff]
    %v114 = vld [vmem:[#allocation7 + $0x78] sm:$0xff]
    %v115 = vld [vmem:[%s2] sm:$0x1]
    %v117 = vperm.slane %v115, 0
    %119 = vmatpush.xpose.msra.mxu0 %v114
    %120 = vmatpush.xpose.msra.mxu0 %v113
    %121 = vmatpush.xpose.msra.mxu0 %v112
    %122 = vmatpush.xpose.msra.mxu0 %v111
    %123 = vmatpush.xpose.msra.mxu0 %v110
    %124 = vmatpush.xpose.msra.mxu0 %v109
    %125 = vmatpush.xpose.msra.mxu0 %v108
    %126 = vmatpush.xpose.msra.mxu0 %v107
    %127 = vmatpush.xpose.msra.mxu0 %v106
    %128 = vmatpush.xpose.msra.mxu0 %v105
    %129 = vmatpush.xpose.msra.mxu0 %v104
    %130 = vmatpush.xpose.msra.mxu0 %v103
    %131 = vmatpush.xpose.msra.mxu0 %v102
    %132 = vmatpush.xpose.msra.mxu0 %v101
    %133 = vmatpush.xpose.msra.mxu0 %v100
    %134 = vmatpush.xpose.msra.mxu0 %v99
    %135 = vmatmul.f32.gmra.mxu0 %v83
    %v136 = vpop.f32.mrf.mxu0
    %v137 = vadd.f32 %v117, %v136
    %138 = vmatmul.f32.gmra.mxu0 %v84
    %v139 = vpop.f32.mrf.mxu0
    %v140 = vadd.f32 %v117, %v139
    %141 = vmatmul.f32.gmra.mxu0 %v85
    %v142 = vpop.f32.mrf.mxu0
    %v143 = vadd.f32 %v117, %v142
    %144 = vmatmul.f32.gmra.mxu0 %v86
    %v145 = vpop.f32.mrf.mxu0
    %v146 = vadd.f32 %v117, %v145
    %147 = vmatmul.f32.gmra.mxu0 %v87
    %v148 = vpop.f32.mrf.mxu0
    %v149 = vadd.f32 %v117, %v148
    %150 = vmatmul.f32.gmra.mxu0 %v88
    %v151 = vpop.f32.mrf.mxu0
    %v152 = vadd.f32 %v117, %v151
    %153 = vmatmul.f32.gmra.mxu0 %v89
    %v154 = vpop.f32.mrf.mxu0
    %v155 = vadd.f32 %v117, %v154
    %156 = vmatmul.f32.gmra.mxu0 %v90
    %v157 = vpop.f32.mrf.mxu0
    %v158 = vadd.f32 %v117, %v157
    %159 = vmatmul.f32.gmra.mxu0 %v91
    %v160 = vpop.f32.mrf.mxu0
    %v161 = vadd.f32 %v117, %v160
    %162 = vmatmul.f32.gmra.mxu0 %v92
    %v163 = vpop.f32.mrf.mxu0
    %v164 = vadd.f32 %v117, %v163
    %165 = vmatmul.f32.gmra.mxu0 %v93
    %v166 = vpop.f32.mrf.mxu0
    %v167 = vadd.f32 %v117, %v166
    %168 = vmatmul.f32.gmra.mxu0 %v94
    %v169 = vpop.f32.mrf.mxu0
    %v170 = vadd.f32 %v117, %v169
    %171 = vmatmul.f32.gmra.mxu0 %v95
    %v172 = vpop.f32.mrf.mxu0
    %v173 = vadd.f32 %v117, %v172
    %174 = vmatmul.f32.gmra.mxu0 %v96
    %v175 = vpop.f32.mrf.mxu0
    %v176 = vadd.f32 %v117, %v175
    %177 = vmatmul.f32.gmra.mxu0 %v97
    %v178 = vpop.f32.mrf.mxu0
    %v179 = vadd.f32 %v117, %v178
    %180 = vmatmul.f32.gmra.mxu0 %v98
    %v181 = vpop.f32.mrf.mxu0
    %v182 = vadd.f32 %v117, %v181
    %183 = vdwg.mxu0
    %s184 = smul.u32 0, 128
    %s185 = smul.u32 0, 128
    %s186 = sadd.s32 %s185, 128
    %p187 = scmp.lt.s32.totalorder %s184, %s186
    %s188 = sadd.s32 %s184, 128
    %p189 = scmp.lt.s32.totalorder %s185, %s188
    %p190 = pnand %p187, %p189
    %p191 = pneg %p190
    // Predicated region
    $region26: #{tpu_custom_call.1} parent=1 // pred_check
      _
    $region27: #{tpu_custom_call.1} parent=1 // pred_check_branch
      %193 = sbr.rel (%p190) target = $region29
    $region28: #{tpu_custom_call.1} parent=1 // pred_region
      %v194 = vlaneseq
      %v195 = vshrl.u32 %v194, 7
      %v196 = vadd.s32 %v195, 8
      %v197 = vadd.s32 %v195, 16
      %v198 = vadd.s32 %v195, 24
      %v199 = vadd.s32 %v195, 32
      %v200 = vadd.s32 %v195, 40
      %v201 = vadd.s32 %v195, 48
      %v202 = vadd.s32 %v195, 56
      %v203 = vadd.s32 %v195, 64
      %v204 = vadd.s32 %v195, 72
      %v205 = vadd.s32 %v195, 80
      %v206 = vadd.s32 %v195, 88
      %v207 = vadd.s32 %v195, 96
      %v208 = vadd.s32 %v195, 104
      %v209 = vadd.s32 %v195, 112
      %v210 = vadd.s32 %v195, 120
      %v211 = vstv %s184
      %v212 = vadd.s32 %v211, %v195
      %v213 = vadd.s32 %v211, %v196
      %v214 = vadd.s32 %v211, %v197
      %v215 = vadd.s32 %v211, %v198
      %v216 = vadd.s32 %v211, %v199
      %v217 = vadd.s32 %v211, %v200
      %v218 = vadd.s32 %v211, %v201
      %v219 = vadd.s32 %v211, %v202
      %v220 = vadd.s32 %v211, %v203
      %v221 = vadd.s32 %v211, %v204
      %v222 = vadd.s32 %v211, %v205
      %v223 = vadd.s32 %v211, %v206
      %v224 = vadd.s32 %v211, %v207
      %v225 = vadd.s32 %v211, %v208
      %v226 = vadd.s32 %v211, %v209
      %v227 = vadd.s32 %v211, %v210
      %v228 = vlaneseq
      %v229 = vand.u32 %v228, 127
      %v230 = vstv %s185
      %v231 = vadd.s32 %v230, %v229
      %vm232 = vcmp.eq.s32.totalorder %v212, %v231
      %vm233 = vcmp.eq.s32.totalorder %v213, %v231
      %vm234 = vcmp.eq.s32.totalorder %v214, %v231
      %vm235 = vcmp.eq.s32.totalorder %v215, %v231
      %vm236 = vcmp.eq.s32.totalorder %v216, %v231
      %vm237 = vcmp.eq.s32.totalorder %v217, %v231
      %vm238 = vcmp.eq.s32.totalorder %v218, %v231
      %vm239 = vcmp.eq.s32.totalorder %v219, %v231
      %vm240 = vcmp.eq.s32.totalorder %v220, %v231
      %vm241 = vcmp.eq.s32.totalorder %v221, %v231
      %vm242 = vcmp.eq.s32.totalorder %v222, %v231
      %vm243 = vcmp.eq.s32.totalorder %v223, %v231
      %vm244 = vcmp.eq.s32.totalorder %v224, %v231
      %vm245 = vcmp.eq.s32.totalorder %v225, %v231
      %vm246 = vcmp.eq.s32.totalorder %v226, %v231
      %vm247 = vcmp.eq.s32.totalorder %v227, %v231
      %v248 = vsel %vm232, -1e+12, %v137
      %v249 = vsel %vm233, -1e+12, %v140
      %v250 = vsel %vm234, -1e+12, %v143
      %v251 = vsel %vm235, -1e+12, %v146
      %v252 = vsel %vm236, -1e+12, %v149
      %v253 = vsel %vm237, -1e+12, %v152
      %v254 = vsel %vm238, -1e+12, %v155
      %v255 = vsel %vm239, -1e+12, %v158
      %v256 = vsel %vm240, -1e+12, %v161
      %v257 = vsel %vm241, -1e+12, %v164
      %v258 = vsel %vm242, -1e+12, %v167
      %v259 = vsel %vm243, -1e+12, %v170
      %v260 = vsel %vm244, -1e+12, %v173
      %v261 = vsel %vm245, -1e+12, %v176
      %v262 = vsel %vm246, -1e+12, %v179
      %v263 = vsel %vm247, -1e+12, %v182
      %v264 = vld [vmem:[#allocation2] sm:$0xff]
      %v265 = vld [vmem:[#allocation2 + $0x8] sm:$0xff]
      %v266 = vld [vmem:[#allocation2 + $0x10] sm:$0xff]
      %v267 = vld [vmem:[#allocation2 + $0x18] sm:$0xff]
      %v268 = vld [vmem:[#allocation2 + $0x20] sm:$0xff]
      %v269 = vld [vmem:[#allocation2 + $0x28] sm:$0xff]
      %v270 = vld [vmem:[#allocation2 + $0x30] sm:$0xff]
      %v271 = vld [vmem:[#allocation2 + $0x38] sm:$0xff]
      %v272 = vld [vmem:[#allocation2 + $0x40] sm:$0xff]
      %v273 = vld [vmem:[#allocation2 + $0x48] sm:$0xff]
      %v274 = vld [vmem:[#allocation2 + $0x50] sm:$0xff]
      %v275 = vld [vmem:[#allocation2 + $0x58] sm:$0xff]
      %v276 = vld [vmem:[#allocation2 + $0x60] sm:$0xff]
      %v277 = vld [vmem:[#allocation2 + $0x68] sm:$0xff]
      %v278 = vld [vmem:[#allocation2 + $0x70] sm:$0xff]
      %v279 = vld [vmem:[#allocation2 + $0x78] sm:$0xff]
      %v280 = vld [vmem:[#allocation3] sm:$0xff]
      %v281 = vld [vmem:[#allocation3 + $0x8] sm:$0xff]
      %v282 = vld [vmem:[#allocation3 + $0x10] sm:$0xff]
      %v283 = vld [vmem:[#allocation3 + $0x18] sm:$0xff]
      %v284 = vld [vmem:[#allocation3 + $0x20] sm:$0xff]
      %v285 = vld [vmem:[#allocation3 + $0x28] sm:$0xff]
      %v286 = vld [vmem:[#allocation3 + $0x30] sm:$0xff]
      %v287 = vld [vmem:[#allocation3 + $0x38] sm:$0xff]
      %v288 = vld [vmem:[#allocation3 + $0x40] sm:$0xff]
      %v289 = vld [vmem:[#allocation3 + $0x48] sm:$0xff]
      %v290 = vld [vmem:[#allocation3 + $0x50] sm:$0xff]
      %v291 = vld [vmem:[#allocation3 + $0x58] sm:$0xff]
      %v292 = vld [vmem:[#allocation3 + $0x60] sm:$0xff]
      %v293 = vld [vmem:[#allocation3 + $0x68] sm:$0xff]
      %v294 = vld [vmem:[#allocation3 + $0x70] sm:$0xff]
      %v295 = vld [vmem:[#allocation3 + $0x78] sm:$0xff]
      %v296 = vmax.f32 %v264, %v248
      %v297 = vmax.f32 %v265, %v249
      %v298 = vmax.f32 %v266, %v250
      %v299 = vmax.f32 %v267, %v251
      %v300 = vmax.f32 %v268, %v252
      %v301 = vmax.f32 %v269, %v253
      %v302 = vmax.f32 %v270, %v254
      %v303 = vmax.f32 %v271, %v255
      %v304 = vmax.f32 %v272, %v256
      %v305 = vmax.f32 %v273, %v257
      %v306 = vmax.f32 %v274, %v258
      %v307 = vmax.f32 %v275, %v259
      %v308 = vmax.f32 %v276, %v260
      %v309 = vmax.f32 %v277, %v261
      %v310 = vmax.f32 %v278, %v262
      %v311 = vmax.f32 %v279, %v263
      %v312 = vsub.f32 %v264, %v296
      %v313 = vsub.f32 %v265, %v297
      %v314 = vsub.f32 %v266, %v298
      %v315 = vsub.f32 %v267, %v299
      %v316 = vsub.f32 %v268, %v300
      %v317 = vsub.f32 %v269, %v301
      %v318 = vsub.f32 %v270, %v302
      %v319 = vsub.f32 %v271, %v303
      %v320 = vsub.f32 %v272, %v304
      %v321 = vsub.f32 %v273, %v305
      %v322 = vsub.f32 %v274, %v306
      %v323 = vsub.f32 %v275, %v307
      %v324 = vsub.f32 %v276, %v308
      %v325 = vsub.f32 %v277, %v309
      %v326 = vsub.f32 %v278, %v310
      %v327 = vsub.f32 %v279, %v311
      %v328 = vmul.f32 %v312, 1.442695
      %v329 = vpow.pop %v328
      %v330 = vmul.f32 %v313, 1.442695
      %v331 = vpow.pop %v330
      %v332 = vmul.f32 %v314, 1.442695
      %v333 = vpow.pop %v332
      %v334 = vmul.f32 %v315, 1.442695
      %v335 = vpow.pop %v334
      %v336 = vmul.f32 %v316, 1.442695
      %v337 = vpow.pop %v336
      %v338 = vmul.f32 %v317, 1.442695
      %v339 = vpow.pop %v338
      %v340 = vmul.f32 %v318, 1.442695
      %v341 = vpow.pop %v340
      %v342 = vmul.f32 %v319, 1.442695
      %v343 = vpow.pop %v342
      %v344 = vmul.f32 %v320, 1.442695
      %v345 = vpow.pop %v344
      %v346 = vmul.f32 %v321, 1.442695
      %v347 = vpow.pop %v346
      %v348 = vmul.f32 %v322, 1.442695
      %v349 = vpow.pop %v348
      %v350 = vmul.f32 %v323, 1.442695
      %v351 = vpow.pop %v350
      %v352 = vmul.f32 %v324, 1.442695
      %v353 = vpow.pop %v352
      %v354 = vmul.f32 %v325, 1.442695
      %v355 = vpow.pop %v354
      %v356 = vmul.f32 %v326, 1.442695
      %v357 = vpow.pop %v356
      %v358 = vmul.f32 %v327, 1.442695
      %v359 = vpow.pop %v358
      %v360 = vmul.f32 %v280, %v329
      %v361 = vmul.f32 %v281, %v331
      %v362 = vmul.f32 %v282, %v333
      %v363 = vmul.f32 %v283, %v335
      %v364 = vmul.f32 %v284, %v337
      %v365 = vmul.f32 %v285, %v339
      %v366 = vmul.f32 %v286, %v341
      %v367 = vmul.f32 %v287, %v343
      %v368 = vmul.f32 %v288, %v345
      %v369 = vmul.f32 %v289, %v347
      %v370 = vmul.f32 %v290, %v349
      %v371 = vmul.f32 %v291, %v351
      %v372 = vmul.f32 %v292, %v353
      %v373 = vmul.f32 %v293, %v355
      %v374 = vmul.f32 %v294, %v357
      %v375 = vmul.f32 %v295, %v359
      %v376 = vsub.f32 %v248, %v296
      %v377 = vsub.f32 %v249, %v297
      %v378 = vsub.f32 %v250, %v298
      %v379 = vsub.f32 %v251, %v299
      %v380 = vsub.f32 %v252, %v300
      %v381 = vsub.f32 %v253, %v301
      %v382 = vsub.f32 %v254, %v302
      %v383 = vsub.f32 %v255, %v303
      %v384 = vsub.f32 %v256, %v304
      %v385 = vsub.f32 %v257, %v305
      %v386 = vsub.f32 %v258, %v306
      %v387 = vsub.f32 %v259, %v307
      %v388 = vsub.f32 %v260, %v308
      %v389 = vsub.f32 %v261, %v309
      %v390 = vsub.f32 %v262, %v310
      %v391 = vsub.f32 %v263, %v311
      %v392 = vmul.f32 %v376, 1.442695
      %v393 = vpow.pop %v392
      %v394 = vmul.f32 %v377, 1.442695
      %v395 = vpow.pop %v394
      %v396 = vmul.f32 %v378, 1.442695
      %v397 = vpow.pop %v396
      %v398 = vmul.f32 %v379, 1.442695
      %v399 = vpow.pop %v398
      %v400 = vmul.f32 %v380, 1.442695
      %v401 = vpow.pop %v400
      %v402 = vmul.f32 %v381, 1.442695
      %v403 = vpow.pop %v402
      %v404 = vmul.f32 %v382, 1.442695
      %v405 = vpow.pop %v404
      %v406 = vmul.f32 %v383, 1.442695
      %v407 = vpow.pop %v406
      %v408 = vmul.f32 %v384, 1.442695
      %v409 = vpow.pop %v408
      %v410 = vmul.f32 %v385, 1.442695
      %v411 = vpow.pop %v410
      %v412 = vmul.f32 %v386, 1.442695
      %v413 = vpow.pop %v412
      %v414 = vmul.f32 %v387, 1.442695
      %v415 = vpow.pop %v414
      %v416 = vmul.f32 %v388, 1.442695
      %v417 = vpow.pop %v416
      %v418 = vmul.f32 %v389, 1.442695
      %v419 = vpow.pop %v418
      %v420 = vmul.f32 %v390, 1.442695
      %v421 = vpow.pop %v420
      %v422 = vmul.f32 %v391, 1.442695
      %v423 = vpow.pop %v422
      %v424 = vadd.f32 %v360, %v393
      %v425 = vadd.f32 %v361, %v395
      %v426 = vadd.f32 %v362, %v397
      %v427 = vadd.f32 %v363, %v399
      %v428 = vadd.f32 %v364, %v401
      %v429 = vadd.f32 %v365, %v403
      %v430 = vadd.f32 %v366, %v405
      %v431 = vadd.f32 %v367, %v407
      %v432 = vadd.f32 %v368, %v409
      %v433 = vadd.f32 %v369, %v411
      %v434 = vadd.f32 %v370, %v413
      %v435 = vadd.f32 %v371, %v415
      %v436 = vadd.f32 %v372, %v417
      %v437 = vadd.f32 %v373, %v419
      %v438 = vadd.f32 %v374, %v421
      %v439 = vadd.f32 %v375, %v423
      %440 = vst [vmem:[#allocation2] sm:$0xff] %v296
      %441 = vst [vmem:[#allocation2 + $0x8] sm:$0xff] %v297
      %442 = vst [vmem:[#allocation2 + $0x10] sm:$0xff] %v298
      %443 = vst [vmem:[#allocation2 + $0x18] sm:$0xff] %v299
      %444 = vst [vmem:[#allocation2 + $0x20] sm:$0xff] %v300
      %445 = vst [vmem:[#allocation2 + $0x28] sm:$0xff] %v301
      %446 = vst [vmem:[#allocation2 + $0x30] sm:$0xff] %v302
      %447 = vst [vmem:[#allocation2 + $0x38] sm:$0xff] %v303
      %448 = vst [vmem:[#allocation2 + $0x40] sm:$0xff] %v304
      %449 = vst [vmem:[#allocation2 + $0x48] sm:$0xff] %v305
      %450 = vst [vmem:[#allocation2 + $0x50] sm:$0xff] %v306
      %451 = vst [vmem:[#allocation2 + $0x58] sm:$0xff] %v307
      %452 = vst [vmem:[#allocation2 + $0x60] sm:$0xff] %v308
      %453 = vst [vmem:[#allocation2 + $0x68] sm:$0xff] %v309
      %454 = vst [vmem:[#allocation2 + $0x70] sm:$0xff] %v310
      %455 = vst [vmem:[#allocation2 + $0x78] sm:$0xff] %v311
      %456 = vst [vmem:[#allocation3] sm:$0xff] %v424
      %457 = vst [vmem:[#allocation3 + $0x8] sm:$0xff] %v425
      %458 = vst [vmem:[#allocation3 + $0x10] sm:$0xff] %v426
      %459 = vst [vmem:[#allocation3 + $0x18] sm:$0xff] %v427
      %460 = vst [vmem:[#allocation3 + $0x20] sm:$0xff] %v428
      %461 = vst [vmem:[#allocation3 + $0x28] sm:$0xff] %v429
      %462 = vst [vmem:[#allocation3 + $0x30] sm:$0xff] %v430
      %463 = vst [vmem:[#allocation3 + $0x38] sm:$0xff] %v431
      %464 = vst [vmem:[#allocation3 + $0x40] sm:$0xff] %v432
      %465 = vst [vmem:[#allocation3 + $0x48] sm:$0xff] %v433
      %466 = vst [vmem:[#allocation3 + $0x50] sm:$0xff] %v434
      %467 = vst [vmem:[#allocation3 + $0x58] sm:$0xff] %v435
      %468 = vst [vmem:[#allocation3 + $0x60] sm:$0xff] %v436
      %469 = vst [vmem:[#allocation3 + $0x68] sm:$0xff] %v437
      %470 = vst [vmem:[#allocation3 + $0x70] sm:$0xff] %v438
      %471 = vst [vmem:[#allocation3 + $0x78] sm:$0xff] %v439
    $region29: #{tpu_custom_call.1} parent=1 // pred_fallthru
      _
    %p472 = pneg %p191
    // Predicated region
    $region30: #{tpu_custom_call.1} parent=1 // pred_check
      _
    $region31: #{tpu_custom_call.1} parent=1 // pred_check_branch
      %474 = sbr.rel (%p191) target = $region33
    $region32: #{tpu_custom_call.1} parent=1 // pred_region
      %v475 = vld [vmem:[#allocation2] sm:$0xff]
      %v476 = vld [vmem:[#allocation2 + $0x8] sm:$0xff]
      %v477 = vld [vmem:[#allocation2 + $0x10] sm:$0xff]
      %v478 = vld [vmem:[#allocation2 + $0x18] sm:$0xff]
      %v479 = vld [vmem:[#allocation2 + $0x20] sm:$0xff]
      %v480 = vld [vmem:[#allocation2 + $0x28] sm:$0xff]
      %v481 = vld [vmem:[#allocation2 + $0x30] sm:$0xff]
      %v482 = vld [vmem:[#allocation2 + $0x38] sm:$0xff]
      %v483 = vld [vmem:[#allocation2 + $0x40] sm:$0xff]
      %v484 = vld [vmem:[#allocation2 + $0x48] sm:$0xff]
      %v485 = vld [vmem:[#allocation2 + $0x50] sm:$0xff]
      %v486 = vld [vmem:[#allocation2 + $0x58] sm:$0xff]
      %v487 = vld [vmem:[#allocation2 + $0x60] sm:$0xff]
      %v488 = vld [vmem:[#allocation2 + $0x68] sm:$0xff]
      %v489 = vld [vmem:[#allocation2 + $0x70] sm:$0xff]
      %v490 = vld [vmem:[#allocation2 + $0x78] sm:$0xff]
      %v491 = vld [vmem:[#allocation3] sm:$0xff]
      %v492 = vld [vmem:[#allocation3 + $0x8] sm:$0xff]
      %v493 = vld [vmem:[#allocation3 + $0x10] sm:$0xff]
      %v494 = vld [vmem:[#allocation3 + $0x18] sm:$0xff]
      %v495 = vld [vmem:[#allocation3 + $0x20] sm:$0xff]
      %v496 = vld [vmem:[#allocation3 + $0x28] sm:$0xff]
      %v497 = vld [vmem:[#allocation3 + $0x30] sm:$0xff]
      %v498 = vld [vmem:[#allocation3 + $0x38] sm:$0xff]
      %v499 = vld [vmem:[#allocation3 + $0x40] sm:$0xff]
      %v500 = vld [vmem:[#allocation3 + $0x48] sm:$0xff]
      %v501 = vld [vmem:[#allocation3 + $0x50] sm:$0xff]
      %v502 = vld [vmem:[#allocation3 + $0x58] sm:$0xff]
      %v503 = vld [vmem:[#allocation3 + $0x60] sm:$0xff]
      %v504 = vld [vmem:[#allocation3 + $0x68] sm:$0xff]
      %v505 = vld [vmem:[#allocation3 + $0x70] sm:$0xff]
      %v506 = vld [vmem:[#allocation3 + $0x78] sm:$0xff]
      %v507 = vmax.f32 %v475, %v137
      %v508 = vmax.f32 %v476, %v140
      %v509 = vmax.f32 %v477, %v143
      %v510 = vmax.f32 %v478, %v146
      %v511 = vmax.f32 %v479, %v149
      %v512 = vmax.f32 %v480, %v152
      %v513 = vmax.f32 %v481, %v155
      %v514 = vmax.f32 %v482, %v158
      %v515 = vmax.f32 %v483, %v161
      %v516 = vmax.f32 %v484, %v164
      %v517 = vmax.f32 %v485, %v167
      %v518 = vmax.f32 %v486, %v170
      %v519 = vmax.f32 %v487, %v173
      %v520 = vmax.f32 %v488, %v176
      %v521 = vmax.f32 %v489, %v179
      %v522 = vmax.f32 %v490, %v182
      %v523 = vsub.f32 %v475, %v507
      %v524 = vsub.f32 %v476, %v508
      %v525 = vsub.f32 %v477, %v509
      %v526 = vsub.f32 %v478, %v510
      %v527 = vsub.f32 %v479, %v511
      %v528 = vsub.f32 %v480, %v512
      %v529 = vsub.f32 %v481, %v513
      %v530 = vsub.f32 %v482, %v514
      %v531 = vsub.f32 %v483, %v515
      %v532 = vsub.f32 %v484, %v516
      %v533 = vsub.f32 %v485, %v517
      %v534 = vsub.f32 %v486, %v518
      %v535 = vsub.f32 %v487, %v519
      %v536 = vsub.f32 %v488, %v520
      %v537 = vsub.f32 %v489, %v521
      %v538 = vsub.f32 %v490, %v522
      %v539 = vmul.f32 %v523, 1.442695
      %v540 = vpow.pop %v539
      %v541 = vmul.f32 %v524, 1.442695
      %v542 = vpow.pop %v541
      %v543 = vmul.f32 %v525, 1.442695
      %v544 = vpow.pop %v543
      %v545 = vmul.f32 %v526, 1.442695
      %v546 = vpow.pop %v545
      %v547 = vmul.f32 %v527, 1.442695
      %v548 = vpow.pop %v547
      %v549 = vmul.f32 %v528, 1.442695
      %v550 = vpow.pop %v549
      %v551 = vmul.f32 %v529, 1.442695
      %v552 = vpow.pop %v551
      %v553 = vmul.f32 %v530, 1.442695
      %v554 = vpow.pop %v553
      %v555 = vmul.f32 %v531, 1.442695
      %v556 = vpow.pop %v555
      %v557 = vmul.f32 %v532, 1.442695
      %v558 = vpow.pop %v557
      %v559 = vmul.f32 %v533, 1.442695
      %v560 = vpow.pop %v559
      %v561 = vmul.f32 %v534, 1.442695
      %v562 = vpow.pop %v561
      %v563 = vmul.f32 %v535, 1.442695
      %v564 = vpow.pop %v563
      %v565 = vmul.f32 %v536, 1.442695
      %v566 = vpow.pop %v565
      %v567 = vmul.f32 %v537, 1.442695
      %v568 = vpow.pop %v567
      %v569 = vmul.f32 %v538, 1.442695
      %v570 = vpow.pop %v569
      %v571 = vmul.f32 %v491, %v540
      %v572 = vmul.f32 %v492, %v542
      %v573 = vmul.f32 %v493, %v544
      %v574 = vmul.f32 %v494, %v546
      %v575 = vmul.f32 %v495, %v548
      %v576 = vmul.f32 %v496, %v550
      %v577 = vmul.f32 %v497, %v552
      %v578 = vmul.f32 %v498, %v554
      %v579 = vmul.f32 %v499, %v556
      %v580 = vmul.f32 %v500, %v558
      %v581 = vmul.f32 %v501, %v560
      %v582 = vmul.f32 %v502, %v562
      %v583 = vmul.f32 %v503, %v564
      %v584 = vmul.f32 %v504, %v566
      %v585 = vmul.f32 %v505, %v568
      %v586 = vmul.f32 %v506, %v570
      %v587 = vsub.f32 %v137, %v507
      %v588 = vsub.f32 %v140, %v508
      %v589 = vsub.f32 %v143, %v509
      %v590 = vsub.f32 %v146, %v510
      %v591 = vsub.f32 %v149, %v511
      %v592 = vsub.f32 %v152, %v512
      %v593 = vsub.f32 %v155, %v513
      %v594 = vsub.f32 %v158, %v514
      %v595 = vsub.f32 %v161, %v515
      %v596 = vsub.f32 %v164, %v516
      %v597 = vsub.f32 %v167, %v517
      %v598 = vsub.f32 %v170, %v518
      %v599 = vsub.f32 %v173, %v519
      %v600 = vsub.f32 %v176, %v520
      %v601 = vsub.f32 %v179, %v521
      %v602 = vsub.f32 %v182, %v522
      %v603 = vmul.f32 %v587, 1.442695
      %v604 = vpow.pop %v603
      %v605 = vmul.f32 %v588, 1.442695
      %v606 = vpow.pop %v605
      %v607 = vmul.f32 %v589, 1.442695
      %v608 = vpow.pop %v607
      %v609 = vmul.f32 %v590, 1.442695
      %v610 = vpow.pop %v609
      %v611 = vmul.f32 %v591, 1.442695
      %v612 = vpow.pop %v611
      %v613 = vmul.f32 %v592, 1.442695
      %v614 = vpow.pop %v613
      %v615 = vmul.f32 %v593, 1.442695
      %v616 = vpow.pop %v615
      %v617 = vmul.f32 %v594, 1.442695
      %v618 = vpow.pop %v617
      %v619 = vmul.f32 %v595, 1.442695
      %v620 = vpow.pop %v619
      %v621 = vmul.f32 %v596, 1.442695
      %v622 = vpow.pop %v621
      %v623 = vmul.f32 %v597, 1.442695
      %v624 = vpow.pop %v623
      %v625 = vmul.f32 %v598, 1.442695
      %v626 = vpow.pop %v625
      %v627 = vmul.f32 %v599, 1.442695
      %v628 = vpow.pop %v627
      %v629 = vmul.f32 %v600, 1.442695
      %v630 = vpow.pop %v629
      %v631 = vmul.f32 %v601, 1.442695
      %v632 = vpow.pop %v631
      %v633 = vmul.f32 %v602, 1.442695
      %v634 = vpow.pop %v633
      %v635 = vadd.f32 %v571, %v604
      %v636 = vadd.f32 %v572, %v606
      %v637 = vadd.f32 %v573, %v608
      %v638 = vadd.f32 %v574, %v610
      %v639 = vadd.f32 %v575, %v612
      %v640 = vadd.f32 %v576, %v614
      %v641 = vadd.f32 %v577, %v616
      %v642 = vadd.f32 %v578, %v618
      %v643 = vadd.f32 %v579, %v620
      %v644 = vadd.f32 %v580, %v622
      %v645 = vadd.f32 %v581, %v624
      %v646 = vadd.f32 %v582, %v626
      %v647 = vadd.f32 %v583, %v628
      %v648 = vadd.f32 %v584, %v630
      %v649 = vadd.f32 %v585, %v632
      %v650 = vadd.f32 %v586, %v634
      %651 = vst [vmem:[#allocation2] sm:$0xff] %v507
      %652 = vst [vmem:[#allocation2 + $0x8] sm:$0xff] %v508
      %653 = vst [vmem:[#allocation2 + $0x10] sm:$0xff] %v509
      %654 = vst [vmem:[#allocation2 + $0x18] sm:$0xff] %v510
      %655 = vst [vmem:[#allocation2 + $0x20] sm:$0xff] %v511
      %656 = vst [vmem:[#allocation2 + $0x28] sm:$0xff] %v512
      %657 = vst [vmem:[#allocation2 + $0x30] sm:$0xff] %v513
      %658 = vst [vmem:[#allocation2 + $0x38] sm:$0xff] %v514
      %659 = vst [vmem:[#allocation2 + $0x40] sm:$0xff] %v515
      %660 = vst [vmem:[#allocation2 + $0x48] sm:$0xff] %v516
      %661 = vst [vmem:[#allocation2 + $0x50] sm:$0xff] %v517
      %662 = vst [vmem:[#allocation2 + $0x58] sm:$0xff] %v518
      %663 = vst [vmem:[#allocation2 + $0x60] sm:$0xff] %v519
      %664 = vst [vmem:[#allocation2 + $0x68] sm:$0xff] %v520
      %665 = vst [vmem:[#allocation2 + $0x70] sm:$0xff] %v521
      %666 = vst [vmem:[#allocation2 + $0x78] sm:$0xff] %v522
      %667 = vst [vmem:[#allocation3] sm:$0xff] %v635
      %668 = vst [vmem:[#allocation3 + $0x8] sm:$0xff] %v636
      %669 = vst [vmem:[#allocation3 + $0x10] sm:$0xff] %v637
      %670 = vst [vmem:[#allocation3 + $0x18] sm:$0xff] %v638
      %671 = vst [vmem:[#allocation3 + $0x20] sm:$0xff] %v639
      %672 = vst [vmem:[#allocation3 + $0x28] sm:$0xff] %v640
      %673 = vst [vmem:[#allocation3 + $0x30] sm:$0xff] %v641
      %674 = vst [vmem:[#allocation3 + $0x38] sm:$0xff] %v642
      %675 = vst [vmem:[#allocation3 + $0x40] sm:$0xff] %v643
      %676 = vst [vmem:[#allocation3 + $0x48] sm:$0xff] %v644
      %677 = vst [vmem:[#allocation3 + $0x50] sm:$0xff] %v645
      %678 = vst [vmem:[#allocation3 + $0x58] sm:$0xff] %v646
      %679 = vst [vmem:[#allocation3 + $0x60] sm:$0xff] %v647
      %680 = vst [vmem:[#allocation3 + $0x68] sm:$0xff] %v648
      %681 = vst [vmem:[#allocation3 + $0x70] sm:$0xff] %v649
      %682 = vst [vmem:[#allocation3 + $0x78] sm:$0xff] %v650
    $region33: #{tpu_custom_call.1} parent=1 // pred_fallthru
      _
    // Predicated region
    $region34: #{tpu_custom_call.1} parent=1 // pred_check
      %p683 = pneg %p47
    $region35: #{tpu_custom_call.1} parent=1 // pred_check_branch
      %685 = sbr.rel (%p683) target = $region37
    $region36: #{tpu_custom_call.1} parent=1 // pred_region
      %v686 = vld [vmem:[#allocation2] sm:$0xff]
      %v687 = vld [vmem:[#allocation2 + $0x8] sm:$0xff]
      %v688 = vld [vmem:[#allocation2 + $0x10] sm:$0xff]
      %v689 = vld [vmem:[#allocation2 + $0x18] sm:$0xff]
      %v690 = vld [vmem:[#allocation2 + $0x20] sm:$0xff]
      %v691 = vld [vmem:[#allocation2 + $0x28] sm:$0xff]
      %v692 = vld [vmem:[#allocation2 + $0x30] sm:$0xff]
      %v693 = vld [vmem:[#allocation2 + $0x38] sm:$0xff]
      %v694 = vld [vmem:[#allocation2 + $0x40] sm:$0xff]
      %v695 = vld [vmem:[#allocation2 + $0x48] sm:$0xff]
      %v696 = vld [vmem:[#allocation2 + $0x50] sm:$0xff]
      %v697 = vld [vmem:[#allocation2 + $0x58] sm:$0xff]
      %v698 = vld [vmem:[#allocation2 + $0x60] sm:$0xff]
      %v699 = vld [vmem:[#allocation2 + $0x68] sm:$0xff]
      %v700 = vld [vmem:[#allocation2 + $0x70] sm:$0xff]
      %v701 = vld [vmem:[#allocation2 + $0x78] sm:$0xff]
      %702 = vmax.xlane.f32.xlu0 %v686
      %v703 = vpop.xlane.xlu0 %702
      %704 = vmax.xlane.f32.xlu0 %v687
      %v705 = vpop.xlane.xlu0 %704
      %706 = vmax.xlane.f32.xlu0 %v688
      %v707 = vpop.xlane.xlu0 %706
      %708 = vmax.xlane.f32.xlu0 %v689
      %v709 = vpop.xlane.xlu0 %708
      %710 = vmax.xlane.f32.xlu0 %v690
      %v711 = vpop.xlane.xlu0 %710
      %712 = vmax.xlane.f32.xlu0 %v691
      %v713 = vpop.xlane.xlu0 %712
      %714 = vmax.xlane.f32.xlu0 %v692
      %v715 = vpop.xlane.xlu0 %714
      %716 = vmax.xlane.f32.xlu0 %v693
      %v717 = vpop.xlane.xlu0 %716
      %718 = vmax.xlane.f32.xlu0 %v694
      %v719 = vpop.xlane.xlu0 %718
      %720 = vmax.xlane.f32.xlu0 %v695
      %v721 = vpop.xlane.xlu0 %720
      %722 = vmax.xlane.f32.xlu0 %v696
      %v723 = vpop.xlane.xlu0 %722
      %724 = vmax.xlane.f32.xlu0 %v697
      %v725 = vpop.xlane.xlu0 %724
      %726 = vmax.xlane.f32.xlu0 %v698
      %v727 = vpop.xlane.xlu0 %726
      %728 = vmax.xlane.f32.xlu0 %v699
      %v729 = vpop.xlane.xlu0 %728
      %730 = vmax.xlane.f32.xlu0 %v700
      %v731 = vpop.xlane.xlu0 %730
      %732 = vmax.xlane.f32.xlu0 %v701
      %v733 = vpop.xlane.xlu0 %732
      %v734 = vld [vmem:[#allocation3] sm:$0xff]
      %v735 = vld [vmem:[#allocation3 + $0x8] sm:$0xff]
      %v736 = vld [vmem:[#allocation3 + $0x10] sm:$0xff]
      %v737 = vld [vmem:[#allocation3 + $0x18] sm:$0xff]
      %v738 = vld [vmem:[#allocation3 + $0x20] sm:$0xff]
      %v739 = vld [vmem:[#allocation3 + $0x28] sm:$0xff]
      %v740 = vld [vmem:[#allocation3 + $0x30] sm:$0xff]
      %v741 = vld [vmem:[#allocation3 + $0x38] sm:$0xff]
      %v742 = vld [vmem:[#allocation3 + $0x40] sm:$0xff]
      %v743 = vld [vmem:[#allocation3 + $0x48] sm:$0xff]
      %v744 = vld [vmem:[#allocation3 + $0x50] sm:$0xff]
      %v745 = vld [vmem:[#allocation3 + $0x58] sm:$0xff]
      %v746 = vld [vmem:[#allocation3 + $0x60] sm:$0xff]
      %v747 = vld [vmem:[#allocation3 + $0x68] sm:$0xff]
      %v748 = vld [vmem:[#allocation3 + $0x70] sm:$0xff]
      %v749 = vld [vmem:[#allocation3 + $0x78] sm:$0xff]
      %v750 = vsub.f32 %v686, %v703
      %v751 = vsub.f32 %v687, %v705
      %v752 = vsub.f32 %v688, %v707
      %v753 = vsub.f32 %v689, %v709
      %v754 = vsub.f32 %v690, %v711
      %v755 = vsub.f32 %v691, %v713
      %v756 = vsub.f32 %v692, %v715
      %v757 = vsub.f32 %v693, %v717
      %v758 = vsub.f32 %v694, %v719
      %v759 = vsub.f32 %v695, %v721
      %v760 = vsub.f32 %v696, %v723
      %v761 = vsub.f32 %v697, %v725
      %v762 = vsub.f32 %v698, %v727
      %v763 = vsub.f32 %v699, %v729
      %v764 = vsub.f32 %v700, %v731
      %v765 = vsub.f32 %v701, %v733
      %v766 = vmul.f32 %v750, 1.442695
      %v767 = vpow.pop %v766
      %v768 = vmul.f32 %v751, 1.442695
      %v769 = vpow.pop %v768
      %v770 = vmul.f32 %v752, 1.442695
      %v771 = vpow.pop %v770
      %v772 = vmul.f32 %v753, 1.442695
      %v773 = vpow.pop %v772
      %v774 = vmul.f32 %v754, 1.442695
      %v775 = vpow.pop %v774
      %v776 = vmul.f32 %v755, 1.442695
      %v777 = vpow.pop %v776
      %v778 = vmul.f32 %v756, 1.442695
      %v779 = vpow.pop %v778
      %v780 = vmul.f32 %v757, 1.442695
      %v781 = vpow.pop %v780
      %v782 = vmul.f32 %v758, 1.442695
      %v783 = vpow.pop %v782
      %v784 = vmul.f32 %v759, 1.442695
      %v785 = vpow.pop %v784
      %v786 = vmul.f32 %v760, 1.442695
      %v787 = vpow.pop %v786
      %v788 = vmul.f32 %v761, 1.442695
      %v789 = vpow.pop %v788
      %v790 = vmul.f32 %v762, 1.442695
      %v791 = vpow.pop %v790
      %v792 = vmul.f32 %v763, 1.442695
      %v793 = vpow.pop %v792
      %v794 = vmul.f32 %v764, 1.442695
      %v795 = vpow.pop %v794
      %v796 = vmul.f32 %v765, 1.442695
      %v797 = vpow.pop %v796
      %v798 = vmul.f32 %v734, %v767
      %v799 = vmul.f32 %v735, %v769
      %v800 = vmul.f32 %v736, %v771
      %v801 = vmul.f32 %v737, %v773
      %v802 = vmul.f32 %v738, %v775
      %v803 = vmul.f32 %v739, %v777
      %v804 = vmul.f32 %v740, %v779
      %v805 = vmul.f32 %v741, %v781
      %v806 = vmul.f32 %v742, %v783
      %v807 = vmul.f32 %v743, %v785
      %v808 = vmul.f32 %v744, %v787
      %v809 = vmul.f32 %v745, %v789
      %v810 = vmul.f32 %v746, %v791
      %v811 = vmul.f32 %v747, %v793
      %v812 = vmul.f32 %v748, %v795
      %v813 = vmul.f32 %v749, %v797
      %814 = vadd.xlane.f32.xlu0 %v798
      %v815 = vpop.xlane.xlu0 %814
      %816 = vadd.xlane.f32.xlu0 %v799
      %v817 = vpop.xlane.xlu0 %816
      %818 = vadd.xlane.f32.xlu0 %v800
      %v819 = vpop.xlane.xlu0 %818
      %820 = vadd.xlane.f32.xlu0 %v801
      %v821 = vpop.xlane.xlu0 %820
      %822 = vadd.xlane.f32.xlu0 %v802
      %v823 = vpop.xlane.xlu0 %822
      %824 = vadd.xlane.f32.xlu0 %v803
      %v825 = vpop.xlane.xlu0 %824
      %826 = vadd.xlane.f32.xlu0 %v804
      %v827 = vpop.xlane.xlu0 %826
      %828 = vadd.xlane.f32.xlu0 %v805
      %v829 = vpop.xlane.xlu0 %828
      %830 = vadd.xlane.f32.xlu0 %v806
      %v831 = vpop.xlane.xlu0 %830
      %832 = vadd.xlane.f32.xlu0 %v807
      %v833 = vpop.xlane.xlu0 %832
      %834 = vadd.xlane.f32.xlu0 %v808
      %v835 = vpop.xlane.xlu0 %834
      %836 = vadd.xlane.f32.xlu0 %v809
      %v837 = vpop.xlane.xlu0 %836
      %838 = vadd.xlane.f32.xlu0 %v810
      %v839 = vpop.xlane.xlu0 %838
      %840 = vadd.xlane.f32.xlu0 %v811
      %v841 = vpop.xlane.xlu0 %840
      %842 = vadd.xlane.f32.xlu0 %v812
      %v843 = vpop.xlane.xlu0 %842
      %844 = vadd.xlane.f32.xlu0 %v813
      %v845 = vpop.xlane.xlu0 %844
      %v846 = vlog2.pop %v815
      %v847 = vmul.f32 %v846, 0.6931472
      %v848 = vlog2.pop %v817
      %v849 = vmul.f32 %v848, 0.6931472
      %v850 = vlog2.pop %v819
      %v851 = vmul.f32 %v850, 0.6931472
      %v852 = vlog2.pop %v821
      %v853 = vmul.f32 %v852, 0.6931472
      %v854 = vlog2.pop %v823
      %v855 = vmul.f32 %v854, 0.6931472
      %v856 = vlog2.pop %v825
      %v857 = vmul.f32 %v856, 0.6931472
      %v858 = vlog2.pop %v827
      %v859 = vmul.f32 %v858, 0.6931472
      %v860 = vlog2.pop %v829
      %v861 = vmul.f32 %v860, 0.6931472
      %v862 = vlog2.pop %v831
      %v863 = vmul.f32 %v862, 0.6931472
      %v864 = vlog2.pop %v833
      %v865 = vmul.f32 %v864, 0.6931472
      %v866 = vlog2.pop %v835
      %v867 = vmul.f32 %v866, 0.6931472
      %v868 = vlog2.pop %v837
      %v869 = vmul.f32 %v868, 0.6931472
      %v870 = vlog2.pop %v839
      %v871 = vmul.f32 %v870, 0.6931472
      %v872 = vlog2.pop %v841
      %v873 = vmul.f32 %v872, 0.6931472
      %v874 = vlog2.pop %v843
      %v875 = vmul.f32 %v874, 0.6931472
      %v876 = vlog2.pop %v845
      %v877 = vmul.f32 %v876, 0.6931472
      %v878 = vadd.f32 %v703, %v847
      %v879 = vadd.f32 %v705, %v849
      %v880 = vadd.f32 %v707, %v851
      %v881 = vadd.f32 %v709, %v853
      %v882 = vadd.f32 %v711, %v855
      %v883 = vadd.f32 %v713, %v857
      %v884 = vadd.f32 %v715, %v859
      %v885 = vadd.f32 %v717, %v861
      %v886 = vadd.f32 %v719, %v863
      %v887 = vadd.f32 %v721, %v865
      %v888 = vadd.f32 %v723, %v867
      %v889 = vadd.f32 %v725, %v869
      %v890 = vadd.f32 %v727, %v871
      %v891 = vadd.f32 %v729, %v873
      %v892 = vadd.f32 %v731, %v875
      %v893 = vadd.f32 %v733, %v877
      %894 = vst [vmem:[#allocation9] sm:$0xff] %v878
      %895 = vst [vmem:[#allocation9 + $0x8] sm:$0xff] %v879
      %896 = vst [vmem:[#allocation9 + $0x10] sm:$0xff] %v880
      %897 = vst [vmem:[#allocation9 + $0x18] sm:$0xff] %v881
      %898 = vst [vmem:[#allocation9 + $0x20] sm:$0xff] %v882
      %899 = vst [vmem:[#allocation9 + $0x28] sm:$0xff] %v883
      %900 = vst [vmem:[#allocation9 + $0x30] sm:$0xff] %v884
      %901 = vst [vmem:[#allocation9 + $0x38] sm:$0xff] %v885
      %902 = vst [vmem:[#allocation9 + $0x40] sm:$0xff] %v886
      %903 = vst [vmem:[#allocation9 + $0x48] sm:$0xff] %v887
      %904 = vst [vmem:[#allocation9 + $0x50] sm:$0xff] %v888
      %905 = vst [vmem:[#allocation9 + $0x58] sm:$0xff] %v889
      %906 = vst [vmem:[#allocation9 + $0x60] sm:$0xff] %v890
      %907 = vst [vmem:[#allocation9 + $0x68] sm:$0xff] %v891
      %908 = vst [vmem:[#allocation9 + $0x70] sm:$0xff] %v892
      %909 = vst [vmem:[#allocation9 + $0x78] sm:$0xff] %v893
    $region37: #{tpu_custom_call.1} parent=1 // pred_fallthru
      _
    // Predicated region
    $region38: #{tpu_custom_call.1} parent=1 // pred_check
      _
    $region39: #{tpu_custom_call.1} parent=1 // pred_check_branch
      %911 = sbr.rel (0) target = $region41
    $region40: #{tpu_custom_call.1} parent=1 // pred_region
      %913 = vsyncadd [#allocation6], 0
      %s914 = sshll.u32 [#allocation9], 4
      %s915 = int_to_ptr.vmem [resolvable:$true] %s914
      %s916 = sshll.u32 %s3, 4
      %s917 = int_to_ptr.hbm [resolvable:$true] %s916
      %922 = dma.vmem_to_hbm [thread:$0]  %s915, 2048, %s917, [#allocation6], 128, 128, 8
    $region41: #{tpu_custom_call.1} parent=1 // pred_fallthru
      _
    // Predicated region
    $region42: #{tpu_custom_call.1} parent=1 // pred_check
      _
    $region43: #{tpu_custom_call.1} parent=1 // pred_check_branch
      %924 = sbr.rel (0) target = $region45
    $region44: #{tpu_custom_call.1} parent=1 // pred_region
      %926 = dma.done [#allocation6], 2048
    $region45: #{tpu_custom_call.1} parent=1 // pred_fallthru
      _
    %927 = vsyncpa [#allocation5], 1
    %928 = vsyncpa [#allocation8], 1
    %929 = vsyncpa [#allocation6], 1

</llo_original>
